<compile_context>
chip_gen: v6e
topology: v6e:2x2x1
jax: 0.10.0
libtpu: 0.0.40
codegen_flags: <defaults>
</compile_context>

<pallas_src>
import functools
import math

import jax
import jax.numpy as jnp
from jax.experimental import pallas as pl
from jax.experimental.pallas import tpu as pltpu


_VMEM_LIMIT = 32 * 1024 * 1024  # safe scoped-VMEM budget on v5e / v6e / v7x


# ----------------------------------------------------------------------------
# tiling helpers
# ----------------------------------------------------------------------------

def _pick_tile(n, target):
    """Largest multiple-of-8 divisor of n that is <= target, else n (full dim)."""
    if n <= target:
        return n
    start = target - (target % 8)
    for cand in range(start, 0, -8):
        if n % cand == 0:
            return cand
    return n


def _pick_head_group(heads, d_k):
    """Heads per grid step so the head-column block is lane-dense (128) or full d_model."""
    if d_k % 128 == 0:
        return 1
    if d_k < 128 and 128 % d_k == 0:
        g = 128 // d_k
        if heads % g == 0:
            return g
    return heads  # full d_model column block (always a legal BlockSpec)


# ----------------------------------------------------------------------------
# fused tiled linear: y_i = x_i @ w_i + b_i for 1..n triples in ONE pallas_call
# ----------------------------------------------------------------------------

def _fused_linear_kernel(*refs, n, compute_dtype):
    x_refs = refs[:n]
    w_refs = refs[n:2 * n]
    b_refs = refs[2 * n:3 * n]
    y_refs = refs[3 * n:]
    for xr, wr, br, yr in zip(x_refs, w_refs, b_refs, y_refs):
        acc = jnp.dot(xr[...].astype(compute_dtype),
                      wr[...].astype(compute_dtype),
                      preferred_element_type=jnp.float32)
        yr[...] = (acc + br[...]).astype(yr.dtype)  # bias add stays f32


def pallas_fused_linear(xs, ws, biases, *, compute_dtype=jnp.float32, tile_rows=512):
    """xs: list of (N, d_in); ws: list of (d_in, d_out); biases: list of (d_out,)."""
    n = len(xs)
    rows, d_in = xs[0].shape
    d_out = ws[0].shape[1]
    tm = _pick_tile(rows, tile_rows)

    in_specs = (
        [pl.BlockSpec((tm, d_in), lambda i: (i, 0)) for _ in range(n)]
        + [pl.BlockSpec((d_in, d_out), lambda i: (0, 0)) for _ in range(n)]
        + [pl.BlockSpec((1, d_out), lambda i: (0, 0)) for _ in range(n)]
    )
    out_specs = tuple(pl.BlockSpec((tm, d_out), lambda i: (i, 0)) for _ in range(n))
    out_shape = tuple(jax.ShapeDtypeStruct((rows, d_out), jnp.float32) for _ in range(n))

    cost = pl.CostEstimate(
        flops=int(2 * n * rows * d_in * d_out),
        transcendentals=0,
        bytes_accessed=int(4 * n * (rows * d_in + d_in * d_out + d_out + rows * d_out)),
    )
    kernel = functools.partial(_fused_linear_kernel, n=n, compute_dtype=compute_dtype)
    return pl.pallas_call(
        kernel,
        out_shape=out_shape,
        grid=(rows // tm,),
        in_specs=in_specs,
        out_specs=out_specs,
        compiler_params=pltpu.CompilerParams(
            dimension_semantics=("parallel",),
            vmem_limit_bytes=_VMEM_LIMIT,
        ),
        cost_estimate=cost,
    )(*xs, *ws, *[b.reshape(1, d_out) for b in biases])


# ----------------------------------------------------------------------------
# raw attention: head-grouped, query-tiled, writes the "concat" layout directly
# ----------------------------------------------------------------------------

def _raw_attention_kernel(q_ref, k_ref, v_ref, o_ref, s_ref, *,
                          d_k, g_heads, compute_dtype):
    # q_ref: (1, tq, G*d_k); k_ref / v_ref: (1, S, G*d_k)
    # o_ref: (1, tq, G*d_k) slice of the (bs, S, d_model) concat output
    # s_ref: (1, G, tq, S) slice of the (bs, heads, S, S) raw scores
    inv_sqrt_dk = jnp.float32(1.0 / math.sqrt(d_k))
    outs = []
    for h in range(g_heads):  # static, small loop (G*d_k <= ~128 or d_model)
        col = pl.ds(h * d_k, d_k)
        qh = q_ref[0, :, col].astype(compute_dtype)   # (tq, d_k)
        kh = k_ref[0, :, col].astype(compute_dtype)   # (S,  d_k)
        vh = v_ref[0, :, col].astype(compute_dtype)   # (S,  d_k)
        # q @ k^T without an explicit transpose: contract the last dim of both.
        scores = jax.lax.dot_general(
            qh, kh,
            dimension_numbers=(((1,), (1,)), ((), ())),
            preferred_element_type=jnp.float32,
        ) * inv_sqrt_dk
        s_ref[0, h] = scores.astype(s_ref.dtype)
        # TODO(synk): dropout on scores (train mode) is treated as identity.
        outs.append(jnp.dot(scores.astype(compute_dtype), vh,
                            preferred_element_type=jnp.float32))
    # One lane-dense store: per-head outputs already in "concat" column order.
    o_ref[0] = jnp.concatenate(outs, axis=-1).astype(o_ref.dtype)


def pallas_raw_attention(qp, kp, vp, heads, d_k, *,
                         compute_dtype=jnp.float32, tile_q=256):
    """qp/kp/vp: (bs, S, d_model) projected tensors (head h = columns h*d_k...).

    Returns (concat (bs, S, d_model), scores (bs, heads, S, S)).
    """
    bs, s, d_model = qp.shape
    g = _pick_head_group(heads, d_k)
    tq = _pick_tile(s, tile_q)
    n_groups = heads // g
    n_qt = s // tq
    gcols = g * d_k

    kernel = functools.partial(
        _raw_attention_kernel, d_k=d_k, g_heads=g, compute_dtype=compute_dtype)

    cost = pl.CostEstimate(
        flops=int(4 * bs * heads * s * s * d_k),
        transcendentals=0,
        bytes_accessed=int(4 * (3 * bs * s * d_model      # q/k/v reads
                                + bs * heads * s * s      # scores writeback (dominant)
                                + bs * s * d_model)),     # concat write
    )

    concat, scores = pl.pallas_call(
        kernel,
        out_shape=(
            jax.ShapeDtypeStruct((bs, s, d_model), jnp.float32),   # concat
            jax.ShapeDtypeStruct((bs, heads, s, s), jnp.float32),  # raw scores
        ),
        grid=(bs, n_groups, n_qt),
        in_specs=[
            pl.BlockSpec((1, tq, gcols), lambda b, gi, qi: (b, qi, gi)),  # q tile
            pl.BlockSpec((1, s, gcols), lambda b, gi, qi: (b, 0, gi)),    # k (full S)
            pl.BlockSpec((1, s, gcols), lambda b, gi, qi: (b, 0, gi)),    # v (full S)
        ],
        out_specs=(
            pl.BlockSpec((1, tq, gcols), lambda b, gi, qi: (b, qi, gi)),
            pl.BlockSpec((1, g, tq, s), lambda b, gi, qi: (b, gi, qi, 0)),
        ),
        compiler_params=pltpu.CompilerParams(
            dimension_semantics=("parallel", "parallel", "parallel"),
            vmem_limit_bytes=_VMEM_LIMIT,
        ),
        cost_estimate=cost,
    )(qp, kp, vp)
    return concat, scores


# ----------------------------------------------------------------------------
# Module wrapper
# ----------------------------------------------------------------------------

def init_params(key, heads, d_model):
    """Deterministic init matching nn.Linear shapes: W (in, out), b (out,)."""
    bound = 1.0 / math.sqrt(d_model)
    ks = jax.random.split(key, 8)
    u = lambda k, shape: jax.random.uniform(
        k, shape, jnp.float32, minval=-bound, maxval=bound)
    return {
        "q_w": u(ks[0], (d_model, d_model)), "q_b": u(ks[1], (d_model,)),
        "k_w": u(ks[2], (d_model, d_model)), "k_b": u(ks[3], (d_model,)),
        "v_w": u(ks[4], (d_model, d_model)), "v_b": u(ks[5], (d_model,)),
        "o_w": u(ks[6], (d_model, d_model)), "o_b": u(ks[7], (d_model,)),
    }


def raw_multi_head_attention(params, q, k, v, heads, *, compute_dtype=jnp.float32):
    bs, s, d_model = q.shape
    d_k = d_model // heads
    x2d = lambda x: x.reshape(bs * s, d_model)

    # Fused Q/K/V projections: one pipelined pallas_call (3 matmuls share the grid).
    yq, yk, yv = pallas_fused_linear(
        [x2d(q), x2d(k), x2d(v)],
        [params["q_w"], params["k_w"], params["v_w"]],
        [params["q_b"], params["k_b"], params["v_b"]],
        compute_dtype=compute_dtype,
    )
    qp = yq.reshape(bs, s, d_model)   # free reshapes; no transposes
    kp = yk.reshape(bs, s, d_model)
    vp = yv.reshape(bs, s, d_model)

    # Attention consumes the (bs, s, d_model) layout directly (BlockSpec does the
    # head split) and writes the "concat" layout directly (no wrapper transposes).
    concat, attn = pallas_raw_attention(qp, kp, vp, heads, d_k,
                                        compute_dtype=compute_dtype)

    (out2d,) = pallas_fused_linear(
        [concat.reshape(bs * s, d_model)], [params["o_w"]], [params["o_b"]],
        compute_dtype=compute_dtype,
    )
    return out2d.reshape(bs, s, d_model), attn


# ----------------------------------------------------------------------------
# Pure-JAX reference (for a sanity check in the demo)
# ----------------------------------------------------------------------------

def _reference(params, q, k, v, heads):
    bs, s, d_model = q.shape
    d_k = d_model // heads
    hp = jax.lax.Precision.HIGHEST
    lin = lambda x, w, b: jnp.matmul(x, w, precision=hp) + b
    shape = lambda x: x.reshape(bs, s, heads, d_k).transpose(0, 2, 1, 3)
    qh = shape(lin(q, params["q_w"], params["q_b"]))
    kh = shape(lin(k, params["k_w"], params["k_b"]))
    vh = shape(lin(v, params["v_w"], params["v_b"]))
    scores = jnp.einsum("bhqd,bhkd->bhqk", qh, kh, precision=hp) / math.sqrt(d_k)
    out = jnp.einsum("bhqk,bhkd->bhqd", scores, vh, precision=hp)
    concat = out.transpose(0, 2, 1, 3).reshape(bs, s, d_model)
    return lin(concat, params["o_w"], params["o_b"]), scores


# ----------------------------------------------------------------------------
# Demo
# ----------------------------------------------------------------------------

if __name__ == "__main__":
    heads, d_model = 4, 32
    bs, seq = 2, 8

    key = jax.random.PRNGKey(0)
    kp_, kq_, kk_, kv_ = jax.random.split(key, 4)
    params = init_params(kp_, heads, d_model)

    q = jax.random.normal(kq_, (bs, seq, d_model), jnp.float32)
    k = jax.random.normal(kk_, (bs, seq, d_model), jnp.float32)
    v = jax.random.normal(kv_, (bs, seq, d_model), jnp.float32)

    output, attn = raw_multi_head_attention(params, q, k, v, heads)
    jax.block_until_ready((output, attn))

    assert output.shape == (bs, seq, d_model)
    assert attn.shape == (bs, heads, seq, seq)

    ref_out, ref_attn = _reference(params, q, k, v, heads)
    assert jnp.allclose(output, ref_out, atol=1e-2, rtol=1e-2)
    assert jnp.allclose(attn, ref_attn, atol=1e-2, rtol=1e-2)

    print("KERNEL_OK")
</pallas_src>

<mosaic_0001>
module attributes {stable_mosaic.version = 11 : i64} {
  func.func @_fused_linear_kernel(%arg0: i32, %arg1: memref<16x32xf32, #tpu.memory_space<vmem>>, %arg2: memref<16x32xf32, #tpu.memory_space<vmem>>, %arg3: memref<16x32xf32, #tpu.memory_space<vmem>>, %arg4: memref<32x32xf32, #tpu.memory_space<vmem>>, %arg5: memref<32x32xf32, #tpu.memory_space<vmem>>, %arg6: memref<32x32xf32, #tpu.memory_space<vmem>>, %arg7: memref<1x32xf32, #tpu.memory_space<vmem>>, %arg8: memref<1x32xf32, #tpu.memory_space<vmem>>, %arg9: memref<1x32xf32, #tpu.memory_space<vmem>>, %arg10: memref<16x32xf32, #tpu.memory_space<vmem>>, %arg11: memref<16x32xf32, #tpu.memory_space<vmem>>, %arg12: memref<16x32xf32, #tpu.memory_space<vmem>>) attributes {dimension_semantics = [#tpu.dimension_semantics<parallel>], iteration_bounds = array<i64: 1>, scalar_prefetch = 0 : i64, scratch_operands = 0 : i64, tpu.core_type = #tpu.core_type<tc>, window_params = [{transform_indices = @transform_0, window_bounds = array<i64: 16, 32>}, {transform_indices = @transform_1, window_bounds = array<i64: 16, 32>}, {transform_indices = @transform_2, window_bounds = array<i64: 16, 32>}, {pipeline_mode = #tpu.pipeline_mode<synchronous>, transform_indices = @transform_3, window_bounds = array<i64: 32, 32>}, {pipeline_mode = #tpu.pipeline_mode<synchronous>, transform_indices = @transform_4, window_bounds = array<i64: 32, 32>}, {pipeline_mode = #tpu.pipeline_mode<synchronous>, transform_indices = @transform_5, window_bounds = array<i64: 32, 32>}, {pipeline_mode = #tpu.pipeline_mode<synchronous>, transform_indices = @transform_6, window_bounds = array<i64: 1, 32>}, {pipeline_mode = #tpu.pipeline_mode<synchronous>, transform_indices = @transform_7, window_bounds = array<i64: 1, 32>}, {pipeline_mode = #tpu.pipeline_mode<synchronous>, transform_indices = @transform_8, window_bounds = array<i64: 1, 32>}, {transform_indices = @transform_9, window_bounds = array<i64: 16, 32>}, {transform_indices = @transform_10, window_bounds = array<i64: 16, 32>}, {transform_indices = @transform_11, window_bounds = array<i64: 16, 32>}]} {
    %c0 = arith.constant 0 : index
    %c0_0 = arith.constant 0 : index
    %0 = vector.load %arg1[%c0, %c0_0] : memref<16x32xf32, #tpu.memory_space<vmem>>, vector<16x32xf32>
    %c0_1 = arith.constant 0 : index
    %c0_2 = arith.constant 0 : index
    %1 = vector.load %arg4[%c0_1, %c0_2] : memref<32x32xf32, #tpu.memory_space<vmem>>, vector<32x32xf32>
    %cst = arith.constant dense<0.000000e+00> : vector<16x32xf32>
    %2 = tpu.matmul %0, %1, %cst {dimension_numbers = #tpu.dot_dimension_numbers<[1], [0], [0], [1], [0, 0, 1, 1], [], []>} : vector<16x32xf32>, vector<32x32xf32>, vector<16x32xf32> -> vector<16x32xf32>
    %c0_3 = arith.constant 0 : index
    %c0_4 = arith.constant 0 : index
    %3 = vector.load %arg7[%c0_3, %c0_4] : memref<1x32xf32, #tpu.memory_space<vmem>>, vector<1x32xf32>
    %4 = vector.broadcast %3 : vector<1x32xf32> to vector<16x32xf32>
    %5 = arith.addf %2, %4 : vector<16x32xf32>
    %c0_5 = arith.constant 0 : index
    %c0_6 = arith.constant 0 : index
    %6 = vector.load %arg10[%c0_5, %c0_6] : memref<16x32xf32, #tpu.memory_space<vmem>>, vector<16x32xf32>
    tpu.vector_store %arg10[%c0_5, %c0_6], %5 {strides = array<i32>} : memref<16x32xf32, #tpu.memory_space<vmem>>, vector<16x32xf32>,
    %c0_7 = arith.constant 0 : index
    %c0_8 = arith.constant 0 : index
    %7 = vector.load %arg2[%c0_7, %c0_8] : memref<16x32xf32, #tpu.memory_space<vmem>>, vector<16x32xf32>
    %c0_9 = arith.constant 0 : index
    %c0_10 = arith.constant 0 : index
    %8 = vector.load %arg5[%c0_9, %c0_10] : memref<32x32xf32, #tpu.memory_space<vmem>>, vector<32x32xf32>
    %cst_11 = arith.constant dense<0.000000e+00> : vector<16x32xf32>
    %9 = tpu.matmul %7, %8, %cst_11 {dimension_numbers = #tpu.dot_dimension_numbers<[1], [0], [0], [1], [0, 0, 1, 1], [], []>} : vector<16x32xf32>, vector<32x32xf32>, vector<16x32xf32> -> vector<16x32xf32>
    %c0_12 = arith.constant 0 : index
    %c0_13 = arith.constant 0 : index
    %10 = vector.load %arg8[%c0_12, %c0_13] : memref<1x32xf32, #tpu.memory_space<vmem>>, vector<1x32xf32>
    %11 = vector.broadcast %10 : vector<1x32xf32> to vector<16x32xf32>
    %12 = arith.addf %9, %11 : vector<16x32xf32>
    %c0_14 = arith.constant 0 : index
    %c0_15 = arith.constant 0 : index
    %13 = vector.load %arg11[%c0_14, %c0_15] : memref<16x32xf32, #tpu.memory_space<vmem>>, vector<16x32xf32>
    tpu.vector_store %arg11[%c0_14, %c0_15], %12 {strides = array<i32>} : memref<16x32xf32, #tpu.memory_space<vmem>>, vector<16x32xf32>,
    %c0_16 = arith.constant 0 : index
    %c0_17 = arith.constant 0 : index
    %14 = vector.load %arg3[%c0_16, %c0_17] : memref<16x32xf32, #tpu.memory_space<vmem>>, vector<16x32xf32>
    %c0_18 = arith.constant 0 : index
    %c0_19 = arith.constant 0 : index
    %15 = vector.load %arg6[%c0_18, %c0_19] : memref<32x32xf32, #tpu.memory_space<vmem>>, vector<32x32xf32>
    %cst_20 = arith.constant dense<0.000000e+00> : vector<16x32xf32>
    %16 = tpu.matmul %14, %15, %cst_20 {dimension_numbers = #tpu.dot_dimension_numbers<[1], [0], [0], [1], [0, 0, 1, 1], [], []>} : vector<16x32xf32>, vector<32x32xf32>, vector<16x32xf32> -> vector<16x32xf32>
    %c0_21 = arith.constant 0 : index
    %c0_22 = arith.constant 0 : index
    %17 = vector.load %arg9[%c0_21, %c0_22] : memref<1x32xf32, #tpu.memory_space<vmem>>, vector<1x32xf32>
    %18 = vector.broadcast %17 : vector<1x32xf32> to vector<16x32xf32>
    %19 = arith.addf %16, %18 : vector<16x32xf32>
    %c0_23 = arith.constant 0 : index
    %c0_24 = arith.constant 0 : index
    %20 = vector.load %arg12[%c0_23, %c0_24] : memref<16x32xf32, #tpu.memory_space<vmem>>, vector<16x32xf32>
    tpu.vector_store %arg12[%c0_23, %c0_24], %19 {strides = array<i32>} : memref<16x32xf32, #tpu.memory_space<vmem>>, vector<16x32xf32>,
    return
  }
  func.func @transform_0(%arg0: i32) -> (i32, i32) {
    %c0_i32 = arith.constant 0 : i32
    %c0_i32_0 = arith.constant 0 : i32
    return %arg0, %c0_i32 : i32, i32
  }
  func.func @transform_1(%arg0: i32) -> (i32, i32) {
    %c0_i32 = arith.constant 0 : i32
    %c0_i32_0 = arith.constant 0 : i32
    return %arg0, %c0_i32 : i32, i32
  }
  func.func @transform_2(%arg0: i32) -> (i32, i32) {
    %c0_i32 = arith.constant 0 : i32
    %c0_i32_0 = arith.constant 0 : i32
    return %arg0, %c0_i32 : i32, i32
  }
  func.func @transform_3(%arg0: i32) -> (i32, i32) {
    %c0_i32 = arith.constant 0 : i32
    %c0_i32_0 = arith.constant 0 : i32
    %c0_i32_1 = arith.constant 0 : i32
    return %c0_i32, %c0_i32_0 : i32, i32
  }
  func.func @transform_4(%arg0: i32) -> (i32, i32) {
    %c0_i32 = arith.constant 0 : i32
    %c0_i32_0 = arith.constant 0 : i32
    %c0_i32_1 = arith.constant 0 : i32
    return %c0_i32, %c0_i32_0 : i32, i32
  }
  func.func @transform_5(%arg0: i32) -> (i32, i32) {
    %c0_i32 = arith.constant 0 : i32
    %c0_i32_0 = arith.constant 0 : i32
    %c0_i32_1 = arith.constant 0 : i32
    return %c0_i32, %c0_i32_0 : i32, i32
  }
  func.func @transform_6(%arg0: i32) -> (i32, i32) {
    %c0_i32 = arith.constant 0 : i32
    %c0_i32_0 = arith.constant 0 : i32
    %c0_i32_1 = arith.constant 0 : i32
    return %c0_i32, %c0_i32_0 : i32, i32
  }
  func.func @transform_7(%arg0: i32) -> (i32, i32) {
    %c0_i32 = arith.constant 0 : i32
    %c0_i32_0 = arith.constant 0 : i32
    %c0_i32_1 = arith.constant 0 : i32
    return %c0_i32, %c0_i32_0 : i32, i32
  }
  func.func @transform_8(%arg0: i32) -> (i32, i32) {
    %c0_i32 = arith.constant 0 : i32
    %c0_i32_0 = arith.constant 0 : i32
    %c0_i32_1 = arith.constant 0 : i32
    return %c0_i32, %c0_i32_0 : i32, i32
  }
  func.func @transform_9(%arg0: i32) -> (i32, i32) {
    %c0_i32 = arith.constant 0 : i32
    %c0_i32_0 = arith.constant 0 : i32
    return %arg0, %c0_i32 : i32, i32
  }
  func.func @transform_10(%arg0: i32) -> (i32, i32) {
    %c0_i32 = arith.constant 0 : i32
    %c0_i32_0 = arith.constant 0 : i32
    return %arg0, %c0_i32 : i32, i32
  }
  func.func @transform_11(%arg0: i32) -> (i32, i32) {
    %c0_i32 = arith.constant 0 : i32
    %c0_i32_0 = arith.constant 0 : i32
    return %arg0, %c0_i32 : i32, i32
  }
}

</mosaic_0001>

<llo_original>
// kernel: tpu_custom_call.1
$region0: #{tpu_custom_call.1}
  #allocation0 [shape = 'u32[]', space=smem, size = 0x4, offset = 0x4, fixed_abs, tag = 'smem constant byte address 0x4 - core index']
  #allocation1 [shape = 'u32[144,128]{1,0:T(1,128)}', space=vmem, size = 0x12000, scoped, tag = 'internal scratch']
  %s0 = inlined_call_operand.hbm [shape: f32[16,32], index: 0, kind: input, shape index: {}]
  %s1 = inlined_call_operand.hbm [shape: f32[16,32], index: 1, kind: input, shape index: {}]
  %s2 = inlined_call_operand.hbm [shape: f32[16,32], index: 2, kind: input, shape index: {}]
  %s3 = inlined_call_operand.hbm [shape: f32[32,32], index: 3, kind: input, shape index: {}]
  %s4 = inlined_call_operand.hbm [shape: f32[32,32], index: 4, kind: input, shape index: {}]
  %s5 = inlined_call_operand.hbm [shape: f32[32,32], index: 5, kind: input, shape index: {}]
  %s6 = inlined_call_operand.vmem [shape: f32[1,32], index: 6, kind: input, shape index: {}]
  %s7 = inlined_call_operand.vmem [shape: f32[1,32], index: 7, kind: input, shape index: {}]
  %s8 = inlined_call_operand.vmem [shape: f32[1,32], index: 8, kind: input, shape index: {}]
  %s9 = inlined_call_operand.hbm [shape: f32[16,32], index: 9, kind: output, shape index: {0}]
  %s10 = inlined_call_operand.hbm [shape: f32[16,32], index: 10, kind: output, shape index: {1}]
  %s11 = inlined_call_operand.hbm [shape: f32[16,32], index: 11, kind: output, shape index: {2}]
  %12 = xla_tuple %s9, %s10, %s11
  %s13 = sld [smem:[#allocation0]]
  $region86: #{tpu_custom_call.1} parent=0
    _
  %s15 = ssub.s32 1, %s13
  %s16 = scalar_select 0, %s15, %s13
  $region1: #{tpu_custom_call.1} parent=0
    #allocation2 [shape = 'u8[8192]{0}', space=vmem, size = 0x2000, scoped, tag = 'input window, operand 0, single buffered']
    #allocation3 [shape = 's32[1]{0}', space=sflag, size = 0x4, scoped, tag = 'scoped memory for tpu_custom_call.1']
    #allocation4 [shape = 's32[1]{0}', space=sflag, size = 0x4, scoped, tag = 'scoped memory for tpu_custom_call.1']
    #allocation5 [shape = 'u8[8192]{0}', space=vmem, size = 0x2000, scoped, tag = 'input window, operand 1, single buffered']
    #allocation6 [shape = 's32[1]{0}', space=sflag, size = 0x4, scoped, tag = 'scoped memory for tpu_custom_call.1']
    #allocation7 [shape = 'u8[8192]{0}', space=vmem, size = 0x2000, scoped, tag = 'input window, operand 2, single buffered']
    #allocation8 [shape = 'u8[16384]{0}', space=vmem, size = 0x4000, scoped, tag = 'input window, operand 3, single buffered']
    #allocation9 [shape = 's32[1]{0}', space=sflag, size = 0x4, scoped, tag = 'scoped memory for tpu_custom_call.1']
    #allocation10 [shape = 'u8[16384]{0}', space=vmem, size = 0x4000, scoped, tag = 'input window, operand 4, single buffered']
    #allocation11 [shape = 'u8[16384]{0}', space=vmem, size = 0x4000, scoped, tag = 'input window, operand 5, single buffered']
    #allocation12 [shape = 's32[1]{0}', space=sflag, size = 0x4, scoped, tag = 'scoped memory for tpu_custom_call.1']
    #allocation13 [shape = 'u8[8192]{0}', space=vmem, size = 0x2000, scoped, tag = 'output window, operand 0, single buffered']
    #allocation14 [shape = 'u8[8192]{0}', space=vmem, size = 0x2000, scoped, tag = 'output window, operand 1, single buffered']
    #allocation15 [shape = 's32[1]{0}', space=sflag, size = 0x4, scoped, tag = 'scoped memory for tpu_custom_call.1']
    #allocation16 [shape = 'u8[8192]{0}', space=vmem, size = 0x2000, scoped, tag = 'output window, operand 2, single buffered']
    %17 = vsyncpa [#allocation3], 0
    %18 = vsyncpa [#allocation6], 0
    %19 = vsyncpa [#allocation9], 0
    %20 = vsyncpa [#allocation12], 0
    %21 = vsyncpa [#allocation4], 0
    %22 = vsyncpa [#allocation15], 0
    // Predicated region
    $region2: #{tpu_custom_call.1} parent=1 // pred_check
      _
    $region3: #{tpu_custom_call.1} parent=1 // pred_check_branch
      %24 = sbr.rel (0) target = $region5
    $region4: #{tpu_custom_call.1} parent=1 // pred_region
      %s26 = ssub.s32 256, 256
      %27 = vsyncadd [#allocation3], %s26
      %s28 = sshll.u32 [#allocation2], 4
      %s29 = int_to_ptr.vmem [resolvable:$true] %s28
      %34 = dma.hbm_to_vmem [thread:$0]  %s0, 256, %s29, [#allocation3], 128, 128, 8
    $region5: #{tpu_custom_call.1} parent=1 // pred_fallthru
      _
    // Predicated region
    $region6: #{tpu_custom_call.1} parent=1 // pred_check
      _
    $region7: #{tpu_custom_call.1} parent=1 // pred_check_branch
      %36 = sbr.rel (0) target = $region9
    $region8: #{tpu_custom_call.1} parent=1 // pred_region
      %s38 = ssub.s32 256, 256
      %39 = vsyncadd [#allocation6], %s38
      %s40 = sshll.u32 [#allocation5], 4
      %s41 = int_to_ptr.vmem [resolvable:$true] %s40
      %46 = dma.hbm_to_vmem [thread:$0]  %s1, 256, %s41, [#allocation6], 128, 128, 8
    $region9: #{tpu_custom_call.1} parent=1 // pred_fallthru
      _
    // Predicated region
    $region10: #{tpu_custom_call.1} parent=1 // pred_check
      _
    $region11: #{tpu_custom_call.1} parent=1 // pred_check_branch
      %48 = sbr.rel (0) target = $region13
    $region12: #{tpu_custom_call.1} parent=1 // pred_region
      %s50 = ssub.s32 256, 256
      %51 = vsyncadd [#allocation6], %s50
      %s52 = sshll.u32 [#allocation7], 4
      %s53 = int_to_ptr.vmem [resolvable:$true] %s52
      %58 = dma.hbm_to_vmem [thread:$0]  %s2, 256, %s53, [#allocation6], 128, 128, 8
    $region13: #{tpu_custom_call.1} parent=1 // pred_fallthru
      _
    // Predicated region
    $region14: #{tpu_custom_call.1} parent=1 // pred_check
      _
    $region15: #{tpu_custom_call.1} parent=1 // pred_check_branch
      %60 = sbr.rel (0) target = $region17
    $region16: #{tpu_custom_call.1} parent=1 // pred_region
      %s62 = ssub.s32 512, 512
      %63 = vsyncadd [#allocation9], %s62
      %s64 = sshll.u32 [#allocation8], 4
      %s65 = int_to_ptr.vmem [resolvable:$true] %s64
      %70 = dma.hbm_to_vmem [thread:$0]  %s3, 512, %s65, [#allocation9], 128, 128, 8
    $region17: #{tpu_custom_call.1} parent=1 // pred_fallthru
      _
    // Predicated region
    $region18: #{tpu_custom_call.1} parent=1 // pred_check
      _
    $region19: #{tpu_custom_call.1} parent=1 // pred_check_branch
      %72 = sbr.rel (0) target = $region21
    $region20: #{tpu_custom_call.1} parent=1 // pred_region
      %s74 = ssub.s32 512, 512
      %75 = vsyncadd [#allocation9], %s74
      %s76 = sshll.u32 [#allocation10], 4
      %s77 = int_to_ptr.vmem [resolvable:$true] %s76
      %82 = dma.hbm_to_vmem [thread:$0]  %s4, 512, %s77, [#allocation9], 128, 128, 8
    $region21: #{tpu_custom_call.1} parent=1 // pred_fallthru
      _
    // Predicated region
    $region22: #{tpu_custom_call.1} parent=1 // pred_check
      _
    $region23: #{tpu_custom_call.1} parent=1 // pred_check_branch
      %84 = sbr.rel (0) target = $region25
    $region24: #{tpu_custom_call.1} parent=1 // pred_region
      %s86 = ssub.s32 512, 512
      %87 = vsyncadd [#allocation12], %s86
      %s88 = sshll.u32 [#allocation11], 4
      %s89 = int_to_ptr.vmem [resolvable:$true] %s88
      %94 = dma.hbm_to_vmem [thread:$0]  %s5, 512, %s89, [#allocation12], 128, 128, 8
    $region25: #{tpu_custom_call.1} parent=1 // pred_fallthru
      _
    // Predicated region
    $region26: #{tpu_custom_call.1} parent=1 // pred_check
      _
    $region27: #{tpu_custom_call.1} parent=1 // pred_check_branch
      %96 = sbr.rel (0) target = $region29
    $region28: #{tpu_custom_call.1} parent=1 // pred_region
      _
    $region29: #{tpu_custom_call.1} parent=1 // pred_fallthru
      _
    // Predicated region
    $region30: #{tpu_custom_call.1} parent=1 // pred_check
      _
    $region31: #{tpu_custom_call.1} parent=1 // pred_check_branch
      %98 = sbr.rel (0) target = $region33
    $region32: #{tpu_custom_call.1} parent=1 // pred_region
      _
    $region33: #{tpu_custom_call.1} parent=1 // pred_fallthru
      _
    // Predicated region
    $region34: #{tpu_custom_call.1} parent=1 // pred_check
      _
    $region35: #{tpu_custom_call.1} parent=1 // pred_check_branch
      %100 = sbr.rel (0) target = $region37
    $region36: #{tpu_custom_call.1} parent=1 // pred_region
      _
    $region37: #{tpu_custom_call.1} parent=1 // pred_fallthru
      _
    // Predicated region
    $region38: #{tpu_custom_call.1} parent=1 // pred_check
      _
    $region39: #{tpu_custom_call.1} parent=1 // pred_check_branch
      %102 = sbr.rel (0) target = $region41
    $region40: #{tpu_custom_call.1} parent=1 // pred_region
      %103 = dma.done [#allocation3], 256
    $region41: #{tpu_custom_call.1} parent=1 // pred_fallthru
      _
    // Predicated region
    $region42: #{tpu_custom_call.1} parent=1 // pred_check
      _
    $region43: #{tpu_custom_call.1} parent=1 // pred_check_branch
      %105 = sbr.rel (0) target = $region45
    $region44: #{tpu_custom_call.1} parent=1 // pred_region
      %106 = dma.done [#allocation6], 256
    $region45: #{tpu_custom_call.1} parent=1 // pred_fallthru
      _
    // Predicated region
    $region46: #{tpu_custom_call.1} parent=1 // pred_check
      _
    $region47: #{tpu_custom_call.1} parent=1 // pred_check_branch
      %108 = sbr.rel (0) target = $region49
    $region48: #{tpu_custom_call.1} parent=1 // pred_region
      %109 = dma.done [#allocation6], 256
    $region49: #{tpu_custom_call.1} parent=1 // pred_fallthru
      _
    // Predicated region
    $region50: #{tpu_custom_call.1} parent=1 // pred_check
      _
    $region51: #{tpu_custom_call.1} parent=1 // pred_check_branch
      %111 = sbr.rel (0) target = $region53
    $region52: #{tpu_custom_call.1} parent=1 // pred_region
      %112 = dma.done [#allocation9], 512
    $region53: #{tpu_custom_call.1} parent=1 // pred_fallthru
      _
    // Predicated region
    $region54: #{tpu_custom_call.1} parent=1 // pred_check
      _
    $region55: #{tpu_custom_call.1} parent=1 // pred_check_branch
      %114 = sbr.rel (0) target = $region57
    $region56: #{tpu_custom_call.1} parent=1 // pred_region
      %115 = dma.done [#allocation9], 512
    $region57: #{tpu_custom_call.1} parent=1 // pred_fallthru
      _
    // Predicated region
    $region58: #{tpu_custom_call.1} parent=1 // pred_check
      _
    $region59: #{tpu_custom_call.1} parent=1 // pred_check_branch
      %117 = sbr.rel (0) target = $region61
    $region60: #{tpu_custom_call.1} parent=1 // pred_region
      %118 = dma.done [#allocation12], 512
    $region61: #{tpu_custom_call.1} parent=1 // pred_fallthru
      _
    %v119 = vld [vmem:[#allocation2] sm:$0xff]
    %v120 = vld [vmem:[#allocation2 + $0x8] sm:$0xff]
    %v121 = vld [vmem:[#allocation8] sm:$0xff]
    %v122 = vld [vmem:[#allocation8 + $0x8] sm:$0xff]
    %v123 = vld [vmem:[#allocation8 + $0x10] sm:$0xff]
    %v124 = vld [vmem:[#allocation8 + $0x18] sm:$0xff]
    %v125 = vld [vmem:[%s6] sm:$0x1]
    %v127 = vlaneseq
    %v128 = vshrl.u32 %v127, 7
    %v129 = vsub.s32 0, %v128
    %v130 = vrot.slane %v125, %v129
    %vm132 = vcmask 261120
    %v134 = vsel %vm132, %v119, 0
    %v137 = vsel %vm132, %v120, 0
    %139 = vmatprep.subr.mxu0 0.0
    %140 = vmatpush1.msra.mxu0 0.0
    %141 = vmatprep.subr.mxu0 0.0
    %142 = vmatpush1.msra.mxu0 0.0
    %143 = vmatprep.subr.mxu0 0.0
    %144 = vmatpush1.msra.mxu0 0.0
    %145 = vmatprep.subr.mxu0 0.0
    %146 = vmatpush1.msra.mxu0 0.0
    %147 = vmatprep.subr.mxu0 0.0
    %148 = vmatpush1.msra.mxu0 0.0
    %149 = vmatprep.subr.mxu0 0.0
    %150 = vmatpush1.msra.mxu0 0.0
    %151 = vmatprep.subr.mxu0 0.0
    %152 = vmatpush1.msra.mxu0 0.0
    %153 = vmatprep.subr.mxu0 0.0
    %154 = vmatpush1.msra.mxu0 0.0
    %155 = vmatprep.subr.mxu0 0.0
    %156 = vmatpush1.msra.mxu0 0.0
    %157 = vmatprep.subr.mxu0 0.0
    %158 = vmatpush1.msra.mxu0 0.0
    %159 = vmatprep.subr.mxu0 0.0
    %160 = vmatpush1.msra.mxu0 0.0
    %161 = vmatprep.subr.mxu0 0.0
    %162 = vmatpush1.msra.mxu0 0.0
    %163 = vmatprep.subr.mxu0 0.0
    %164 = vmatpush1.msra.mxu0 %v124
    %165 = vmatprep.subr.mxu0 0.0
    %166 = vmatpush1.msra.mxu0 %v123
    %167 = vmatprep.subr.mxu0 0.0
    %168 = vmatpush1.msra.mxu0 %v122
    %169 = vmatprep.subr.mxu0 0.0
    %170 = vmatpush1.msra.mxu0 %v121
    %171 = vmatprep.subr.mxu0 0.0
    %172 = vmatpush2.msra.mxu0 0.0
    %173 = vmatprep.subr.mxu0 0.0
    %174 = vmatpush2.msra.mxu0 0.0
    %175 = vmatprep.subr.mxu0 0.0
    %176 = vmatpush2.msra.mxu0 0.0
    %177 = vmatprep.subr.mxu0 0.0
    %178 = vmatpush2.msra.mxu0 0.0
    %179 = vmatprep.subr.mxu0 0.0
    %180 = vmatpush2.msra.mxu0 0.0
    %181 = vmatprep.subr.mxu0 0.0
    %182 = vmatpush2.msra.mxu0 0.0
    %183 = vmatprep.subr.mxu0 0.0
    %184 = vmatpush2.msra.mxu0 0.0
    %185 = vmatprep.subr.mxu0 0.0
    %186 = vmatpush2.msra.mxu0 0.0
    %187 = vmatprep.subr.mxu0 0.0
    %188 = vmatpush2.msra.mxu0 0.0
    %189 = vmatprep.subr.mxu0 0.0
    %190 = vmatpush2.msra.mxu0 0.0
    %191 = vmatprep.subr.mxu0 0.0
    %192 = vmatpush2.msra.mxu0 0.0
    %193 = vmatprep.subr.mxu0 0.0
    %194 = vmatpush2.msra.mxu0 0.0
    %195 = vmatprep.subr.mxu0 0.0
    %196 = vmatpush2.msra.mxu0 0.0
    %197 = vmatprep.subr.mxu0 0.0
    %198 = vmatpush2.msra.mxu0 0.0
    %199 = vmatprep.subr.mxu0 0.0
    %200 = vmatpush2.msra.mxu0 0.0
    %201 = vmatprep.subr.mxu0 0.0
    %202 = vmatpush2.msra.mxu0 0.0
    %203 = vmatprep.mubr.f32.mxu0 0.0
    %204 = vmatmul.mubr.f32.gmra.mxu0 %v134
    %v205 = vpop.f32.mrf.mxu0
    %v206 = vadd.f32 %v130, %v205
    %v207 = vpop.f32.mrf.mxu0
    %208 = vmatprep.mubr.f32.mxu0 0.0
    %209 = vmatmul.mubr.f32.gmra.mxu0 %v137
    %v210 = vpop.f32.mrf.mxu0
    %v211 = vadd.f32 %v130, %v210
    %v212 = vpop.f32.mrf.mxu0
    %213 = vdwg.mxu0
    %214 = vst.msk [vmem:[#allocation13] sm:$0xff] %vm132, %v206
    %215 = vst.msk [vmem:[#allocation13 + $0x8] sm:$0xff] %vm132, %v211
    %v216 = vld [vmem:[#allocation5] sm:$0xff]
    %v217 = vld [vmem:[#allocation5 + $0x8] sm:$0xff]
    %v218 = vld [vmem:[#allocation10] sm:$0xff]
    %v219 = vld [vmem:[#allocation10 + $0x8] sm:$0xff]
    %v220 = vld [vmem:[#allocation10 + $0x10] sm:$0xff]
    %v221 = vld [vmem:[#allocation10 + $0x18] sm:$0xff]
    %v222 = vld [vmem:[%s7] sm:$0x1]
    %v224 = vlaneseq
    %v225 = vshrl.u32 %v224, 7
    %v226 = vsub.s32 0, %v225
    %v227 = vrot.slane %v222, %v226
    %v230 = vsel %vm132, %v216, 0
    %v233 = vsel %vm132, %v217, 0
    %235 = vmatprep.subr.mxu0 0.0
    %236 = vmatpush1.msra.mxu0 0.0
    %237 = vmatprep.subr.mxu0 0.0
    %238 = vmatpush1.msra.mxu0 0.0
    %239 = vmatprep.subr.mxu0 0.0
    %240 = vmatpush1.msra.mxu0 0.0
    %241 = vmatprep.subr.mxu0 0.0
    %242 = vmatpush1.msra.mxu0 0.0
    %243 = vmatprep.subr.mxu0 0.0
    %244 = vmatpush1.msra.mxu0 0.0
    %245 = vmatprep.subr.mxu0 0.0
    %246 = vmatpush1.msra.mxu0 0.0
    %247 = vmatprep.subr.mxu0 0.0
    %248 = vmatpush1.msra.mxu0 0.0
    %249 = vmatprep.subr.mxu0 0.0
    %250 = vmatpush1.msra.mxu0 0.0
    %251 = vmatprep.subr.mxu0 0.0
    %252 = vmatpush1.msra.mxu0 0.0
    %253 = vmatprep.subr.mxu0 0.0
    %254 = vmatpush1.msra.mxu0 0.0
    %255 = vmatprep.subr.mxu0 0.0
    %256 = vmatpush1.msra.mxu0 0.0
    %257 = vmatprep.subr.mxu0 0.0
    %258 = vmatpush1.msra.mxu0 0.0
    %259 = vmatprep.subr.mxu0 0.0
    %260 = vmatpush1.msra.mxu0 %v221
    %261 = vmatprep.subr.mxu0 0.0
    %262 = vmatpush1.msra.mxu0 %v220
    %263 = vmatprep.subr.mxu0 0.0
    %264 = vmatpush1.msra.mxu0 %v219
    %265 = vmatprep.subr.mxu0 0.0
    %266 = vmatpush1.msra.mxu0 %v218
    %267 = vmatprep.subr.mxu0 0.0
    %268 = vmatpush2.msra.mxu0 0.0
    %269 = vmatprep.subr.mxu0 0.0
    %270 = vmatpush2.msra.mxu0 0.0
    %271 = vmatprep.subr.mxu0 0.0
    %272 = vmatpush2.msra.mxu0 0.0
    %273 = vmatprep.subr.mxu0 0.0
    %274 = vmatpush2.msra.mxu0 0.0
    %275 = vmatprep.subr.mxu0 0.0
    %276 = vmatpush2.msra.mxu0 0.0
    %277 = vmatprep.subr.mxu0 0.0
    %278 = vmatpush2.msra.mxu0 0.0
    %279 = vmatprep.subr.mxu0 0.0
    %280 = vmatpush2.msra.mxu0 0.0
    %281 = vmatprep.subr.mxu0 0.0
    %282 = vmatpush2.msra.mxu0 0.0
    %283 = vmatprep.subr.mxu0 0.0
    %284 = vmatpush2.msra.mxu0 0.0
    %285 = vmatprep.subr.mxu0 0.0
    %286 = vmatpush2.msra.mxu0 0.0
    %287 = vmatprep.subr.mxu0 0.0
    %288 = vmatpush2.msra.mxu0 0.0
    %289 = vmatprep.subr.mxu0 0.0
    %290 = vmatpush2.msra.mxu0 0.0
    %291 = vmatprep.subr.mxu0 0.0
    %292 = vmatpush2.msra.mxu0 0.0
    %293 = vmatprep.subr.mxu0 0.0
    %294 = vmatpush2.msra.mxu0 0.0
    %295 = vmatprep.subr.mxu0 0.0
    %296 = vmatpush2.msra.mxu0 0.0
    %297 = vmatprep.subr.mxu0 0.0
    %298 = vmatpush2.msra.mxu0 0.0
    %299 = vmatprep.mubr.f32.mxu0 0.0
    %300 = vmatmul.mubr.f32.gmra.mxu0 %v230
    %v301 = vpop.f32.mrf.mxu0
    %v302 = vadd.f32 %v227, %v301
    %v303 = vpop.f32.mrf.mxu0
    %304 = vmatprep.mubr.f32.mxu0 0.0
    %305 = vmatmul.mubr.f32.gmra.mxu0 %v233
    %v306 = vpop.f32.mrf.mxu0
    %v307 = vadd.f32 %v227, %v306
    %v308 = vpop.f32.mrf.mxu0
    %309 = vdwg.mxu0
    %310 = vst.msk [vmem:[#allocation14] sm:$0xff] %vm132, %v302
    %311 = vst.msk [vmem:[#allocation14 + $0x8] sm:$0xff] %vm132, %v307
    %v312 = vld [vmem:[#allocation7] sm:$0xff]
    %v313 = vld [vmem:[#allocation7 + $0x8] sm:$0xff]
    %v314 = vld [vmem:[#allocation11] sm:$0xff]
    %v315 = vld [vmem:[#allocation11 + $0x8] sm:$0xff]
    %v316 = vld [vmem:[#allocation11 + $0x10] sm:$0xff]
    %v317 = vld [vmem:[#allocation11 + $0x18] sm:$0xff]
    %v318 = vld [vmem:[%s8] sm:$0x1]
    %v320 = vlaneseq
    %v321 = vshrl.u32 %v320, 7
    %v322 = vsub.s32 0, %v321
    %v323 = vrot.slane %v318, %v322
    %v326 = vsel %vm132, %v312, 0
    %v329 = vsel %vm132, %v313, 0
    %331 = vmatprep.subr.mxu0 0.0
    %332 = vmatpush1.msra.mxu0 0.0
    %333 = vmatprep.subr.mxu0 0.0
    %334 = vmatpush1.msra.mxu0 0.0
    %335 = vmatprep.subr.mxu0 0.0
    %336 = vmatpush1.msra.mxu0 0.0
    %337 = vmatprep.subr.mxu0 0.0
    %338 = vmatpush1.msra.mxu0 0.0
    %339 = vmatprep.subr.mxu0 0.0
    %340 = vmatpush1.msra.mxu0 0.0
    %341 = vmatprep.subr.mxu0 0.0
    %342 = vmatpush1.msra.mxu0 0.0
    %343 = vmatprep.subr.mxu0 0.0
    %344 = vmatpush1.msra.mxu0 0.0
    %345 = vmatprep.subr.mxu0 0.0
    %346 = vmatpush1.msra.mxu0 0.0
    %347 = vmatprep.subr.mxu0 0.0
    %348 = vmatpush1.msra.mxu0 0.0
    %349 = vmatprep.subr.mxu0 0.0
    %350 = vmatpush1.msra.mxu0 0.0
    %351 = vmatprep.subr.mxu0 0.0
    %352 = vmatpush1.msra.mxu0 0.0
    %353 = vmatprep.subr.mxu0 0.0
    %354 = vmatpush1.msra.mxu0 0.0
    %355 = vmatprep.subr.mxu0 0.0
    %356 = vmatpush1.msra.mxu0 %v317
    %357 = vmatprep.subr.mxu0 0.0
    %358 = vmatpush1.msra.mxu0 %v316
    %359 = vmatprep.subr.mxu0 0.0
    %360 = vmatpush1.msra.mxu0 %v315
    %361 = vmatprep.subr.mxu0 0.0
    %362 = vmatpush1.msra.mxu0 %v314
    %363 = vmatprep.subr.mxu0 0.0
    %364 = vmatpush2.msra.mxu0 0.0
    %365 = vmatprep.subr.mxu0 0.0
    %366 = vmatpush2.msra.mxu0 0.0
    %367 = vmatprep.subr.mxu0 0.0
    %368 = vmatpush2.msra.mxu0 0.0
    %369 = vmatprep.subr.mxu0 0.0
    %370 = vmatpush2.msra.mxu0 0.0
    %371 = vmatprep.subr.mxu0 0.0
    %372 = vmatpush2.msra.mxu0 0.0
    %373 = vmatprep.subr.mxu0 0.0
    %374 = vmatpush2.msra.mxu0 0.0
    %375 = vmatprep.subr.mxu0 0.0
    %376 = vmatpush2.msra.mxu0 0.0
    %377 = vmatprep.subr.mxu0 0.0
    %378 = vmatpush2.msra.mxu0 0.0
    %379 = vmatprep.subr.mxu0 0.0
    %380 = vmatpush2.msra.mxu0 0.0
    %381 = vmatprep.subr.mxu0 0.0
    %382 = vmatpush2.msra.mxu0 0.0
    %383 = vmatprep.subr.mxu0 0.0
    %384 = vmatpush2.msra.mxu0 0.0
    %385 = vmatprep.subr.mxu0 0.0
    %386 = vmatpush2.msra.mxu0 0.0
    %387 = vmatprep.subr.mxu0 0.0
    %388 = vmatpush2.msra.mxu0 0.0
    %389 = vmatprep.subr.mxu0 0.0
    %390 = vmatpush2.msra.mxu0 0.0
    %391 = vmatprep.subr.mxu0 0.0
    %392 = vmatpush2.msra.mxu0 0.0
    %393 = vmatprep.subr.mxu0 0.0
    %394 = vmatpush2.msra.mxu0 0.0
    %395 = vmatprep.mubr.f32.mxu0 0.0
    %396 = vmatmul.mubr.f32.gmra.mxu0 %v326
    %v397 = vpop.f32.mrf.mxu0
    %v398 = vadd.f32 %v323, %v397
    %v399 = vpop.f32.mrf.mxu0
    %400 = vmatprep.mubr.f32.mxu0 0.0
    %401 = vmatmul.mubr.f32.gmra.mxu0 %v329
    %v402 = vpop.f32.mrf.mxu0
    %v403 = vadd.f32 %v323, %v402
    %v404 = vpop.f32.mrf.mxu0
    %405 = vdwg.mxu0
    %406 = vst.msk [vmem:[#allocation16] sm:$0xff] %vm132, %v398
    %407 = vst.msk [vmem:[#allocation16 + $0x8] sm:$0xff] %vm132, %v403
    // Predicated region
    $region62: #{tpu_custom_call.1} parent=1 // pred_check
      _
    $region63: #{tpu_custom_call.1} parent=1 // pred_check_branch
      %409 = sbr.rel (0) target = $region65
    $region64: #{tpu_custom_call.1} parent=1 // pred_region
      %s411 = ssub.s32 256, 256
      %412 = vsyncadd [#allocation4], %s411
      %s413 = sshll.u32 [#allocation13], 4
      %s414 = int_to_ptr.vmem [resolvable:$true] %s413
      %419 = dma.vmem_to_hbm [thread:$0]  %s414, 256, %s9, [#allocation4], 128, 128, 8
    $region65: #{tpu_custom_call.1} parent=1 // pred_fallthru
      _
    // Predicated region
    $region66: #{tpu_custom_call.1} parent=1 // pred_check
      _
    $region67: #{tpu_custom_call.1} parent=1 // pred_check_branch
      %421 = sbr.rel (0) target = $region69
    $region68: #{tpu_custom_call.1} parent=1 // pred_region
      %s423 = ssub.s32 256, 256
      %424 = vsyncadd [#allocation15], %s423
      %s425 = sshll.u32 [#allocation14], 4
      %s426 = int_to_ptr.vmem [resolvable:$true] %s425
      %431 = dma.vmem_to_hbm [thread:$0]  %s426, 256, %s10, [#allocation15], 128, 128, 8
    $region69: #{tpu_custom_call.1} parent=1 // pred_fallthru
      _
    // Predicated region
    $region70: #{tpu_custom_call.1} parent=1 // pred_check
      _
    $region71: #{tpu_custom_call.1} parent=1 // pred_check_branch
      %433 = sbr.rel (0) target = $region73
    $region72: #{tpu_custom_call.1} parent=1 // pred_region
      %s435 = ssub.s32 256, 256
      %436 = vsyncadd [#allocation15], %s435
      %s437 = sshll.u32 [#allocation16], 4
      %s438 = int_to_ptr.vmem [resolvable:$true] %s437
      %443 = dma.vmem_to_hbm [thread:$0]  %s438, 256, %s11, [#allocation15], 128, 128, 8
    $region73: #{tpu_custom_call.1} parent=1 // pred_fallthru
      _
    // Predicated region
    $region74: #{tpu_custom_call.1} parent=1 // pred_check
      _
    $region75: #{tpu_custom_call.1} parent=1 // pred_check_branch
      %445 = sbr.rel (0) target = $region77
    $region76: #{tpu_custom_call.1} parent=1 // pred_region
      %446 = dma.done [#allocation4], 256
    $region77: #{tpu_custom_call.1} parent=1 // pred_fallthru
      _
    // Predicated region
    $region78: #{tpu_custom_call.1} parent=1 // pred_check
      _
    $region79: #{tpu_custom_call.1} parent=1 // pred_check_branch
      %448 = sbr.rel (0) target = $region81
    $region80: #{tpu_custom_call.1} parent=1 // pred_region
      %449 = dma.done [#allocation15], 256
    $region81: #{tpu_custom_call.1} parent=1 // pred_fallthru
      _
    // Predicated region
    $region82: #{tpu_custom_call.1} parent=1 // pred_check
      _
    $region83: #{tpu_custom_call.1} parent=1 // pred_check_branch
      %451 = sbr.rel (0) target = $region85
    $region84: #{tpu_custom_call.1} parent=1 // pred_region
      %452 = dma.done [#allocation15], 256
    $region85: #{tpu_custom_call.1} parent=1 // pred_fallthru
      _
    %453 = vsyncpa [#allocation3], 1
    %454 = vsyncpa [#allocation6], 1
    %455 = vsyncpa [#allocation9], 1
    %456 = vsyncpa [#allocation12], 1
    %457 = vsyncpa [#allocation4], 1
    %458 = vsyncpa [#allocation15], 1

</llo_original>
